<compile_context>
chip_gen: v7x
topology: tpu7x:2x2x1
jax: 0.10.0
libtpu: 0.0.40
codegen_flags: <defaults>
</compile_context>

<pallas_src>
import functools

import jax
import jax.numpy as jnp
from jax.experimental import pallas as pl
from jax.experimental.pallas import tpu as pltpu

LANE = 128          # vreg lane width
SUB = 8             # vreg sublane count
TILE_R_MAX = 4096   # rows per block -> 4096*128*4 B = 2 MiB per f32 input block
NCORES = 2          # outer "parallel" grid axis (both TensorCores on v7x)


def _make_kernel(n_total, tile_r, acc_rows, tiles_per_core):
    block_elems = tile_r * LANE

    def kernel(pr_ref, gt_ref, out_ref, acc_ref):
        i = pl.program_id(1)

        @pl.when(i == 0)
        def _init():
            acc_ref[...] = jnp.zeros_like(acc_ref)

        # Global element index of every slot of this block; masks the ragged
        # tail of the flattened array and any fully out-of-range block.
        tile_idx = pl.program_id(0) * tiles_per_core + i
        base = tile_idx * block_elems
        row = jax.lax.broadcasted_iota(jnp.int32, (tile_r, LANE), 0)
        lane = jax.lax.broadcasted_iota(jnp.int32, (tile_r, LANE), 1)
        valid = (base + row * LANE + lane) < n_total

        x = jnp.where(valid, pr_ref[...].astype(jnp.float32), 0.0)   # logits
        t = jnp.where(valid, gt_ref[...].astype(jnp.float32), 0.0)   # targets
        vm = valid.astype(jnp.float32)

        # sigmoid via one shared exp(-|x|) + approx reciprocal (+1 Newton step
        # for ~f32 accuracy; avoids the exact divide and a second exp).
        e = jnp.exp(-jnp.abs(x))
        d = 1.0 + e
        r = pl.reciprocal(d, approx=True)
        r = r * (2.0 - d * r)
        p = jnp.where(x >= 0.0, 1.0, e) * r      # == sigmoid(x)

        # Numerically stable BCE-with-logits, shares the same exp.
        bce = jnp.maximum(x, 0.0) - x * t + jnp.log1p(e)

        # Reduce (tile_r, 128) -> (acc_rows, 128) with pure vreg adds and
        # accumulate into the resident VMEM vector accumulator.
        if acc_rows == tile_r:
            fold = lambda v: v
        else:
            fold = lambda v: jnp.sum(
                v.reshape(tile_r // acc_rows, acc_rows, LANE), axis=0)

        acc_ref[0] += fold(t * p)       # intersection = sum(gt * sigmoid)
        acc_ref[1] += fold(vm * p)      # sum(sigmoid)
        acc_ref[2] += fold(t)           # sum(gt)
        acc_ref[3] += fold(vm * bce)    # sum(bce elementwise)

        @pl.when(i == pl.num_programs(1) - 1)
        def _finish():
            out_ref[0, 0] = jnp.sum(acc_ref[0])
            out_ref[0, 1] = jnp.sum(acc_ref[1])
            out_ref[0, 2] = jnp.sum(acc_ref[2])
            out_ref[0, 3] = jnp.sum(acc_ref[3])

    return kernel


@functools.partial(jax.jit, static_argnames=("eps",))
def bce_jaccard_loss(y_pr, y_gt, eps=1e-7):
    """Scalar loss identical to BCEJaccardLoss.forward(y_pr, y_gt)."""
    n_total = y_pr.size

    pr = jnp.reshape(y_pr, (-1,))
    gt = jnp.reshape(y_gt, (-1,))

    # Lane-align only when strictly necessary (<=127 extra elements); the
    # common case (size % 128 == 0) is a free reshape, no HBM copy.
    pad = (-n_total) % LANE
    if pad:
        pr = jnp.pad(pr, (0, pad))
        gt = jnp.pad(gt, (0, pad))
    rows = (n_total + pad) // LANE
    pr = pr.reshape(rows, LANE)
    gt = gt.reshape(rows, LANE)

    tile_r = min(rows, TILE_R_MAX)          # big blocks amortize pipeline cost
    acc_rows = SUB if tile_r % SUB == 0 else tile_r
    n_tiles = (rows + tile_r - 1) // tile_r
    ncores = min(NCORES, n_tiles)
    tiles_per_core = (n_tiles + ncores - 1) // ncores

    def in_index_map(c, i):
        # Clamp so overflow steps (when n_tiles % ncores != 0) reuse an
        # in-bounds block; their contribution is masked to zero in-kernel.
        return (jnp.minimum(c * tiles_per_core + i, n_tiles - 1), 0)

    tile_spec = pl.BlockSpec((tile_r, LANE), in_index_map)

    sums = pl.pallas_call(
        _make_kernel(n_total, tile_r, acc_rows, tiles_per_core),
        out_shape=jax.ShapeDtypeStruct((ncores, 4), jnp.float32),
        grid_spec=pltpu.PrefetchScalarGridSpec(
            num_scalar_prefetch=0,
            grid=(ncores, tiles_per_core),
            in_specs=[tile_spec, tile_spec],
            out_specs=pl.BlockSpec(
                (1, 4), lambda c, i: (c, 0),
                memory_space=pltpu.MemorySpace.SMEM),
            scratch_shapes=[pltpu.VMEM((4, acc_rows, LANE), jnp.float32)],
        ),
        compiler_params=pltpu.CompilerParams(
            dimension_semantics=("parallel", "arbitrary")),
    )(pr, gt)

    tot = jnp.sum(sums, axis=0)
    intersection, sum_p, sum_gt, sum_bce = tot[0], tot[1], tot[2], tot[3]

    # Soft Jaccard (activation='sigmoid', threshold=None), as in F.jaccard.
    union = sum_gt + sum_p - intersection + eps
    jaccard_loss = 1.0 - (intersection + eps) / union

    # BCEWithLogitsLoss(reduction='mean') over all elements.
    bce = sum_bce / jnp.float32(n_total)

    return jaccard_loss + bce


def _reference_loss(y_pr, y_gt, eps=1e-7):
    """Pure-JAX reference mirroring the PyTorch module."""
    x = y_pr.reshape(-1).astype(jnp.float32)
    t = y_gt.reshape(-1).astype(jnp.float32)
    p = jax.nn.sigmoid(x)
    intersection = jnp.sum(t * p)
    union = jnp.sum(t) + jnp.sum(p) - intersection + eps
    jaccard_loss = 1.0 - (intersection + eps) / union
    bce = jnp.mean(jnp.maximum(x, 0.0) - x * t + jnp.log1p(jnp.exp(-jnp.abs(x))))
    return jaccard_loss + bce


if __name__ == "__main__":
    key = jax.random.PRNGKey(0)
    k1, k2 = jax.random.split(key)
    # NCHW logits and binary ground-truth masks.
    y_pr = jax.random.normal(k1, (2, 4, 16, 16), dtype=jnp.float32)
    y_gt = jax.random.bernoulli(k2, 0.4, (2, 4, 16, 16)).astype(jnp.float32)

    loss = bce_jaccard_loss(y_pr, y_gt)
    jax.block_until_ready(loss)

    ref = _reference_loss(y_pr, y_gt)
    assert jnp.allclose(loss, ref, rtol=1e-5, atol=1e-5), (loss, ref)

    print("KERNEL_OK")
</pallas_src>

<mosaic_0001>
module attributes {stable_mosaic.version = 11 : i64} {
  func.func @kernel(%arg0: i32, %arg1: i32, %arg2: memref<16x128xf32, #tpu.memory_space<vmem>>, %arg3: memref<16x128xf32, #tpu.memory_space<vmem>>, %arg4: memref<1x4xf32, #tpu.memory_space<smem>>, %arg5: memref<4x8x128xf32, #tpu.memory_space<vmem>>) attributes {dimension_semantics = [#tpu.dimension_semantics<parallel>, #tpu.dimension_semantics<arbitrary>], iteration_bounds = array<i64: 1, 1>, scalar_prefetch = 0 : i64, scratch_operands = 1 : i64, tpu.core_type = #tpu.core_type<tc>, window_params = [{transform_indices = @transform_0, window_bounds = array<i64: 16, 128>}, {transform_indices = @transform_1, window_bounds = array<i64: 16, 128>}, {transform_indices = @transform_2, window_bounds = array<i64: 1, 4>}]} {
    %c0_i32 = arith.constant 0 : i32
    %0 = arith.cmpi eq, %arg1, %c0_i32 : i32
    %1 = arith.extui %0 : i1 to i32
    %c0_i32_0 = arith.constant 0 : i32
    %2 = arith.cmpi ne, %1, %c0_i32_0 : i32
    scf.if %2 {
      %cst_39 = arith.constant 0.000000e+00 : f32
      %83 = vector.broadcast %cst_39 : f32 to vector<4x8x128xf32>
      %c0_40 = arith.constant 0 : index
      %c0_41 = arith.constant 0 : index
      %c0_42 = arith.constant 0 : index
      %84 = vector.load %arg5[%c0_40, %c0_41, %c0_42] : memref<4x8x128xf32, #tpu.memory_space<vmem>>, vector<4x8x128xf32>
      tpu.vector_store %arg5[%c0_40, %c0_41, %c0_42], %83 {strides = array<i32>} : memref<4x8x128xf32, #tpu.memory_space<vmem>>, vector<4x8x128xf32>,
    } else {
    }
    %c1_i32 = arith.constant 1 : i32
    %3 = arith.muli %arg0, %c1_i32 : i32
    %4 = arith.addi %3, %arg1 : i32
    %c2048_i32 = arith.constant 2048 : i32
    %5 = arith.muli %4, %c2048_i32 : i32
    %6 = tpu.iota {dimensions = array<i32: 0>} : vector<16x128xi32>
    %7 = tpu.iota {dimensions = array<i32: 1>} : vector<16x128xi32>
    %c128_i32 = arith.constant 128 : i32
    %8 = vector.broadcast %c128_i32 : i32 to vector<16x128xi32>
    %9 = arith.muli %6, %8 : vector<16x128xi32>
    %10 = vector.broadcast %5 : i32 to vector<16x128xi32>
    %11 = arith.addi %10, %9 : vector<16x128xi32>
    %12 = arith.addi %11, %7 : vector<16x128xi32>
    %c2048_i32_1 = arith.constant 2048 : i32
    %13 = vector.broadcast %c2048_i32_1 : i32 to vector<16x128xi32>
    %14 = arith.cmpi slt, %12, %13 : vector<16x128xi32>
    %c0 = arith.constant 0 : index
    %c0_2 = arith.constant 0 : index
    %15 = vector.load %arg2[%c0, %c0_2] : memref<16x128xf32, #tpu.memory_space<vmem>>, vector<16x128xf32>
    %cst = arith.constant 0.000000e+00 : f32
    %16 = vector.broadcast %cst : f32 to vector<16x128xf32>
    %17 = arith.select %14, %15, %16 : vector<16x128xi1>, vector<16x128xf32>
    %c0_3 = arith.constant 0 : index
    %c0_4 = arith.constant 0 : index
    %18 = vector.load %arg3[%c0_3, %c0_4] : memref<16x128xf32, #tpu.memory_space<vmem>>, vector<16x128xf32>
    %cst_5 = arith.constant 0.000000e+00 : f32
    %19 = vector.broadcast %cst_5 : f32 to vector<16x128xf32>
    %20 = arith.select %14, %18, %19 : vector<16x128xi1>, vector<16x128xf32>
    %21 = arith.extui %14 : vector<16x128xi1> to vector<16x128xi32>
    %22 = arith.sitofp %21 : vector<16x128xi32> to vector<16x128xf32>
    %23 = math.absf %17 : vector<16x128xf32>
    %cst_6 = arith.constant 0.000000e+00 : f32
    %24 = vector.broadcast %cst_6 : f32 to vector<16x128xf32>
    %25 = arith.subf %24, %23 : vector<16x128xf32>
    %26 = math.exp %25 : vector<16x128xf32>
    %cst_7 = arith.constant 1.000000e+00 : f32
    %27 = vector.broadcast %cst_7 : f32 to vector<16x128xf32>
    %28 = arith.addf %27, %26 : vector<16x128xf32>
    %29 = tpu.reciprocal %28 {approx = true} : vector<16x128xf32> -> vector<16x128xf32>
    %30 = arith.mulf %28, %29 : vector<16x128xf32>
    %cst_8 = arith.constant 2.000000e+00 : f32
    %31 = vector.broadcast %cst_8 : f32 to vector<16x128xf32>
    %32 = arith.subf %31, %30 : vector<16x128xf32>
    %33 = arith.mulf %29, %32 : vector<16x128xf32>
    %cst_9 = arith.constant 0.000000e+00 : f32
    %34 = vector.broadcast %cst_9 : f32 to vector<16x128xf32>
    %35 = arith.cmpf oge, %17, %34 : vector<16x128xf32>
    %cst_10 = arith.constant 1.000000e+00 : f32
    %36 = vector.broadcast %cst_10 : f32 to vector<16x128xf32>
    %37 = arith.select %35, %36, %26 : vector<16x128xi1>, vector<16x128xf32>
    %38 = arith.mulf %37, %33 : vector<16x128xf32>
    %cst_11 = arith.constant 0.000000e+00 : f32
    %39 = vector.broadcast %cst_11 : f32 to vector<16x128xf32>
    %40 = arith.maximumf %17, %39 : vector<16x128xf32>
    %41 = arith.mulf %17, %20 : vector<16x128xf32>
    %42 = arith.subf %40, %41 : vector<16x128xf32>
    %43 = math.log1p %26 : vector<16x128xf32>
    %44 = arith.addf %42, %43 : vector<16x128xf32>
    %c0_12 = arith.constant 0 : index
    %c0_13 = arith.constant 0 : index
    %c0_14 = arith.constant 0 : index
    %45 = vector.load %arg5[%c0_12, %c0_13, %c0_14] : memref<4x8x128xf32, #tpu.memory_space<vmem>>, vector<1x8x128xf32>
    %46 = vector.shape_cast %45 : vector<1x8x128xf32> to vector<8x128xf32>
    %47 = arith.mulf %20, %38 : vector<16x128xf32>
    %48 = vector.shape_cast %47 : vector<16x128xf32> to vector<2x8x128xf32>
    %cst_15 = arith.constant dense<0.000000e+00> : vector<8x128xf32>
    %49 = vector.multi_reduction <add>, %48, %cst_15 [0] : vector<2x8x128xf32> to vector<8x128xf32>
    %50 = arith.addf %46, %49 : vector<8x128xf32>
    %c0_16 = arith.constant 0 : index
    %c0_17 = arith.constant 0 : index
    %c0_18 = arith.constant 0 : index
    %51 = vector.load %arg5[%c0_16, %c0_17, %c0_18] : memref<4x8x128xf32, #tpu.memory_space<vmem>>, vector<1x8x128xf32>
    %52 = vector.shape_cast %51 : vector<1x8x128xf32> to vector<8x128xf32>
    %53 = vector.shape_cast %50 : vector<8x128xf32> to vector<1x8x128xf32>
    tpu.vector_store %arg5[%c0_16, %c0_17, %c0_18], %53 {strides = array<i32>} : memref<4x8x128xf32, #tpu.memory_space<vmem>>, vector<1x8x128xf32>,
    %c1 = arith.constant 1 : index
    %c0_19 = arith.constant 0 : index
    %c0_20 = arith.constant 0 : index
    %54 = vector.load %arg5[%c1, %c0_19, %c0_20] : memref<4x8x128xf32, #tpu.memory_space<vmem>>, vector<1x8x128xf32>
    %55 = vector.shape_cast %54 : vector<1x8x128xf32> to vector<8x128xf32>
    %56 = arith.mulf %22, %38 : vector<16x128xf32>
    %57 = vector.shape_cast %56 : vector<16x128xf32> to vector<2x8x128xf32>
    %cst_21 = arith.constant dense<0.000000e+00> : vector<8x128xf32>
    %58 = vector.multi_reduction <add>, %57, %cst_21 [0] : vector<2x8x128xf32> to vector<8x128xf32>
    %59 = arith.addf %55, %58 : vector<8x128xf32>
    %c1_22 = arith.constant 1 : index
    %c0_23 = arith.constant 0 : index
    %c0_24 = arith.constant 0 : index
    %60 = vector.load %arg5[%c1_22, %c0_23, %c0_24] : memref<4x8x128xf32, #tpu.memory_space<vmem>>, vector<1x8x128xf32>
    %61 = vector.shape_cast %60 : vector<1x8x128xf32> to vector<8x128xf32>
    %62 = vector.shape_cast %59 : vector<8x128xf32> to vector<1x8x128xf32>
    tpu.vector_store %arg5[%c1_22, %c0_23, %c0_24], %62 {strides = array<i32>} : memref<4x8x128xf32, #tpu.memory_space<vmem>>, vector<1x8x128xf32>,
    %c2 = arith.constant 2 : index
    %c0_25 = arith.constant 0 : index
    %c0_26 = arith.constant 0 : index
    %63 = vector.load %arg5[%c2, %c0_25, %c0_26] : memref<4x8x128xf32, #tpu.memory_space<vmem>>, vector<1x8x128xf32>
    %64 = vector.shape_cast %63 : vector<1x8x128xf32> to vector<8x128xf32>
    %65 = vector.shape_cast %20 : vector<16x128xf32> to vector<2x8x128xf32>
    %cst_27 = arith.constant dense<0.000000e+00> : vector<8x128xf32>
    %66 = vector.multi_reduction <add>, %65, %cst_27 [0] : vector<2x8x128xf32> to vector<8x128xf32>
    %67 = arith.addf %64, %66 : vector<8x128xf32>
    %c2_28 = arith.constant 2 : index
    %c0_29 = arith.constant 0 : index
    %c0_30 = arith.constant 0 : index
    %68 = vector.load %arg5[%c2_28, %c0_29, %c0_30] : memref<4x8x128xf32, #tpu.memory_space<vmem>>, vector<1x8x128xf32>
    %69 = vector.shape_cast %68 : vector<1x8x128xf32> to vector<8x128xf32>
    %70 = vector.shape_cast %67 : vector<8x128xf32> to vector<1x8x128xf32>
    tpu.vector_store %arg5[%c2_28, %c0_29, %c0_30], %70 {strides = array<i32>} : memref<4x8x128xf32, #tpu.memory_space<vmem>>, vector<1x8x128xf32>,
    %c3 = arith.constant 3 : index
    %c0_31 = arith.constant 0 : index
    %c0_32 = arith.constant 0 : index
    %71 = vector.load %arg5[%c3, %c0_31, %c0_32] : memref<4x8x128xf32, #tpu.memory_space<vmem>>, vector<1x8x128xf32>
    %72 = vector.shape_cast %71 : vector<1x8x128xf32> to vector<8x128xf32>
    %73 = arith.mulf %22, %44 : vector<16x128xf32>
    %74 = vector.shape_cast %73 : vector<16x128xf32> to vector<2x8x128xf32>
    %cst_33 = arith.constant dense<0.000000e+00> : vector<8x128xf32>
    %75 = vector.multi_reduction <add>, %74, %cst_33 [0] : vector<2x8x128xf32> to vector<8x128xf32>
    %76 = arith.addf %72, %75 : vector<8x128xf32>
    %c3_34 = arith.constant 3 : index
    %c0_35 = arith.constant 0 : index
    %c0_36 = arith.constant 0 : index
    %77 = vector.load %arg5[%c3_34, %c0_35, %c0_36] : memref<4x8x128xf32, #tpu.memory_space<vmem>>, vector<1x8x128xf32>
    %78 = vector.shape_cast %77 : vector<1x8x128xf32> to vector<8x128xf32>
    %79 = vector.shape_cast %76 : vector<8x128xf32> to vector<1x8x128xf32>
    tpu.vector_store %arg5[%c3_34, %c0_35, %c0_36], %79 {strides = array<i32>} : memref<4x8x128xf32, #tpu.memory_space<vmem>>, vector<1x8x128xf32>,
    %c0_i32_37 = arith.constant 0 : i32
    %80 = arith.cmpi eq, %arg1, %c0_i32_37 : i32
    %81 = arith.extui %80 : i1 to i32
    %c0_i32_38 = arith.constant 0 : i32
    %82 = arith.cmpi ne, %81, %c0_i32_38 : i32
    scf.if %82 {
      %c0_39 = arith.constant 0 : index
      %c0_40 = arith.constant 0 : index
      %c0_41 = arith.constant 0 : index
      %83 = vector.load %arg5[%c0_39, %c0_40, %c0_41] : memref<4x8x128xf32, #tpu.memory_space<vmem>>, vector<1x8x128xf32>
      %84 = vector.shape_cast %83 : vector<1x8x128xf32> to vector<8x128xf32>
      %85 = vector.shape_cast %84 : vector<8x128xf32> to vector<1x8x128xf32>
      %cst_42 = arith.constant dense<0.000000e+00> : vector<1xf32>
      %86 = vector.multi_reduction <add>, %85, %cst_42 [1, 2] : vector<1x8x128xf32> to vector<1xf32>
      %87 = vector.shape_cast %86 : vector<1xf32> to vector<1x1x1xf32>
      %88 = vector.extract %87[0, 0, 0] : f32 from vector<1x1x1xf32>
      %c0_43 = arith.constant 0 : index
      %c0_44 = arith.constant 0 : index
      %89 = memref.load %arg4[%c0_43, %c0_44] : memref<1x4xf32, #tpu.memory_space<smem>>
      memref.store %88, %arg4[%c0_43, %c0_44] : memref<1x4xf32, #tpu.memory_space<smem>>
      %c1_45 = arith.constant 1 : index
      %c0_46 = arith.constant 0 : index
      %c0_47 = arith.constant 0 : index
      %90 = vector.load %arg5[%c1_45, %c0_46, %c0_47] : memref<4x8x128xf32, #tpu.memory_space<vmem>>, vector<1x8x128xf32>
      %91 = vector.shape_cast %90 : vector<1x8x128xf32> to vector<8x128xf32>
      %92 = vector.shape_cast %91 : vector<8x128xf32> to vector<1x8x128xf32>
      %cst_48 = arith.constant dense<0.000000e+00> : vector<1xf32>
      %93 = vector.multi_reduction <add>, %92, %cst_48 [1, 2] : vector<1x8x128xf32> to vector<1xf32>
      %94 = vector.shape_cast %93 : vector<1xf32> to vector<1x1x1xf32>
      %95 = vector.extract %94[0, 0, 0] : f32 from vector<1x1x1xf32>
      %c0_49 = arith.constant 0 : index
      %c1_50 = arith.constant 1 : index
      %96 = memref.load %arg4[%c0_49, %c1_50] : memref<1x4xf32, #tpu.memory_space<smem>>
      memref.store %95, %arg4[%c0_49, %c1_50] : memref<1x4xf32, #tpu.memory_space<smem>>
      %c2_51 = arith.constant 2 : index
      %c0_52 = arith.constant 0 : index
      %c0_53 = arith.constant 0 : index
      %97 = vector.load %arg5[%c2_51, %c0_52, %c0_53] : memref<4x8x128xf32, #tpu.memory_space<vmem>>, vector<1x8x128xf32>
      %98 = vector.shape_cast %97 : vector<1x8x128xf32> to vector<8x128xf32>
      %99 = vector.shape_cast %98 : vector<8x128xf32> to vector<1x8x128xf32>
      %cst_54 = arith.constant dense<0.000000e+00> : vector<1xf32>
      %100 = vector.multi_reduction <add>, %99, %cst_54 [1, 2] : vector<1x8x128xf32> to vector<1xf32>
      %101 = vector.shape_cast %100 : vector<1xf32> to vector<1x1x1xf32>
      %102 = vector.extract %101[0, 0, 0] : f32 from vector<1x1x1xf32>
      %c0_55 = arith.constant 0 : index
      %c2_56 = arith.constant 2 : index
      %103 = memref.load %arg4[%c0_55, %c2_56] : memref<1x4xf32, #tpu.memory_space<smem>>
      memref.store %102, %arg4[%c0_55, %c2_56] : memref<1x4xf32, #tpu.memory_space<smem>>
      %c3_57 = arith.constant 3 : index
      %c0_58 = arith.constant 0 : index
      %c0_59 = arith.constant 0 : index
      %104 = vector.load %arg5[%c3_57, %c0_58, %c0_59] : memref<4x8x128xf32, #tpu.memory_space<vmem>>, vector<1x8x128xf32>
      %105 = vector.shape_cast %104 : vector<1x8x128xf32> to vector<8x128xf32>
      %106 = vector.shape_cast %105 : vector<8x128xf32> to vector<1x8x128xf32>
      %cst_60 = arith.constant dense<0.000000e+00> : vector<1xf32>
      %107 = vector.multi_reduction <add>, %106, %cst_60 [1, 2] : vector<1x8x128xf32> to vector<1xf32>
      %108 = vector.shape_cast %107 : vector<1xf32> to vector<1x1x1xf32>
      %109 = vector.extract %108[0, 0, 0] : f32 from vector<1x1x1xf32>
      %c0_61 = arith.constant 0 : index
      %c3_62 = arith.constant 3 : index
      %110 = memref.load %arg4[%c0_61, %c3_62] : memref<1x4xf32, #tpu.memory_space<smem>>
      memref.store %109, %arg4[%c0_61, %c3_62] : memref<1x4xf32, #tpu.memory_space<smem>>
    } else {
    }
    return
  }
  func.func @transform_0(%arg0: i32, %arg1: i32) -> (i32, i32) {
    %c1_i32 = arith.constant 1 : i32
    %0 = arith.muli %arg0, %c1_i32 : i32
    %1 = arith.addi %0, %arg1 : i32
    %c0_i32 = arith.constant 0 : i32
    %2 = arith.minsi %1, %c0_i32 : i32
    %c0_i32_0 = arith.constant 0 : i32
    %c0_i32_1 = arith.constant 0 : i32
    return %2, %c0_i32_0 : i32, i32
  }
  func.func @transform_1(%arg0: i32, %arg1: i32) -> (i32, i32) {
    %c1_i32 = arith.constant 1 : i32
    %0 = arith.muli %arg0, %c1_i32 : i32
    %1 = arith.addi %0, %arg1 : i32
    %c0_i32 = arith.constant 0 : i32
    %2 = arith.minsi %1, %c0_i32 : i32
    %c0_i32_0 = arith.constant 0 : i32
    %c0_i32_1 = arith.constant 0 : i32
    return %2, %c0_i32_0 : i32, i32
  }
  func.func @transform_2(%arg0: i32, %arg1: i32) -> (i32, i32) {
    %c0_i32 = arith.constant 0 : i32
    %c0_i32_0 = arith.constant 0 : i32
    return %arg0, %c0_i32 : i32, i32
  }
}

</mosaic_0001>

<llo_original>
// kernel: bce_jaccard_loss.1
$region0: #{bce_jaccard_loss.1}
  #allocation0 [shape = 'u32[]', space=smem, size = 0x4, offset = 0x4, fixed_abs, tag = 'smem constant byte address 0x4 - core index']
  #allocation1 [shape = 'u32[144,128]{1,0:T(1,128)}', space=vmem, size = 0x12000, scoped, tag = 'internal scratch']
  #allocation2 [shape = 'f32[4,8,128]{2,1,0:T(8,128)}', space=vmem, size = 0x4000, scoped, tag = 'scratch operand']
  %s0 = inlined_call_operand.vmem [shape: f32[16,128], index: 0, kind: input, shape index: {}]
  %s1 = inlined_call_operand.vmem [shape: f32[16,128], index: 1, kind: input, shape index: {}]
  %s2 = inlined_call_operand.vmem [shape: f32[1,4], index: 2, kind: output, shape index: {}]
  %s3 = sld [smem:[#allocation0]]
  $region26: #{bce_jaccard_loss.1} parent=0
    _
  %s5 = ssub.s32 1, %s3
  %s6 = scalar_select 0, %s5, %s3
  $region1: #{bce_jaccard_loss.1} parent=0
    #allocation3 [shape = 'u8[512]{0}', space=smem, size = 0x200, scoped, tag = 'output window, operand 0, single buffered']
    #allocation4 [shape = 's32[1]{0}', space=sflag, size = 0x4, scoped, tag = 'scoped memory for bce_jaccard_loss.1']
    %7 = vsyncpa [#allocation4], 0
    // Predicated region
    $region2: #{bce_jaccard_loss.1} parent=1 // pred_check
      _
    $region3: #{bce_jaccard_loss.1} parent=1 // pred_check_branch
      %9 = sbr.rel (0) target = $region5
    $region4: #{bce_jaccard_loss.1} parent=1 // pred_region
      %s10 = sadd.s32 0, 0
      %p11 = scmp.lt.s32.totalorder %s10, 0
      %s12 = scalar_select %p11, %s10, 0
      %s13 = smul.u32 2, %s12
      %p14 = scmp.lt.s32.totalorder %s13, 1
      %s15 = scalar_select %p14, %s13, 1
      %s16 = smul.addr %s15, 8
      %s17 = scalar_lea.vmem %s0, %s16
      %s18 = sadd.s32 0, 0
      %p19 = scmp.lt.s32.totalorder %s18, 0
      %s20 = scalar_select %p19, %s18, 0
      %s21 = smul.u32 2, %s20
    $region5: #{bce_jaccard_loss.1} parent=1 // pred_fallthru
      _
    // Predicated region
    $region6: #{bce_jaccard_loss.1} parent=1 // pred_check
      _
    $region7: #{bce_jaccard_loss.1} parent=1 // pred_check_branch
      %23 = sbr.rel (0) target = $region9
    $region8: #{bce_jaccard_loss.1} parent=1 // pred_region
      %s24 = sadd.s32 0, 0
      %p25 = scmp.lt.s32.totalorder %s24, 0
      %s26 = scalar_select %p25, %s24, 0
      %s27 = smul.u32 2, %s26
      %p28 = scmp.lt.s32.totalorder %s27, 1
      %s29 = scalar_select %p28, %s27, 1
      %s30 = smul.addr %s29, 8
      %s31 = scalar_lea.vmem %s1, %s30
      %s32 = sadd.s32 0, 0
      %p33 = scmp.lt.s32.totalorder %s32, 0
      %s34 = scalar_select %p33, %s32, 0
      %s35 = smul.u32 2, %s34
    $region9: #{bce_jaccard_loss.1} parent=1 // pred_fallthru
      _
    %s36 = sadd.s32 0, 0
    %p37 = scmp.lt.s32.totalorder %s36, 0
    %s38 = scalar_select %p37, %s36, 0
    %s39 = smul.u32 2, %s38
    %p40 = scmp.lt.s32.totalorder %s39, 1
    %s41 = scalar_select %p40, %s39, 1
    %s42 = smul.addr %s41, 8
    %s43 = scalar_lea.vmem %s0, %s42
    %s44 = sadd.s32 0, 0
    %p45 = scmp.lt.s32.totalorder %s44, 0
    %s46 = scalar_select %p45, %s44, 0
    %s47 = smul.u32 2, %s46
    %p48 = scmp.lt.s32.totalorder %s47, 1
    %s49 = scalar_select %p48, %s47, 1
    %s50 = smul.addr %s49, 8
    %s51 = scalar_lea.vmem %s1, %s50
    %s52 = sadd.s32 0, 0
    %p53 = scmp.lt.s32.totalorder %s52, 0
    %s54 = scalar_select %p53, %s52, 0
    %s55 = smul.u32 2, %s54
    %p56 = scmp.lt.s32.totalorder %s55, 1
    %s57 = scalar_select %p56, %s55, 1
    %s58 = smul.addr %s57, 8
    %s59 = scalar_lea.vmem %s0, %s58
    %s60 = sadd.s32 0, 0
    %p61 = scmp.lt.s32.totalorder %s60, 0
    %s62 = scalar_select %p61, %s60, 0
    %s63 = smul.u32 2, %s62
    %s64 = sadd.s32 0, 0
    %p65 = scmp.lt.s32.totalorder %s64, 0
    %s66 = scalar_select %p65, %s64, 0
    %s67 = smul.u32 2, %s66
    %p68 = scmp.lt.s32.totalorder %s67, 1
    %s69 = scalar_select %p68, %s67, 1
    %s70 = smul.addr %s69, 8
    %s71 = scalar_lea.vmem %s1, %s70
    %s72 = sadd.s32 0, 0
    %p73 = scmp.lt.s32.totalorder %s72, 0
    %s74 = scalar_select %p73, %s72, 0
    %s75 = smul.u32 2, %s74
    %p76 = scmp.eq.s32.totalorder 0, 0
    // Predicated region
    $region10: #{bce_jaccard_loss.1} parent=1 // pred_check
      %p77 = pneg %p76
    $region11: #{bce_jaccard_loss.1} parent=1 // pred_check_branch
      %79 = sbr.rel (%p77) target = $region13
    $region12: #{bce_jaccard_loss.1} parent=1 // pred_region
      %80 = vst [vmem:[#allocation2] sm:$0xff] 0.0
      %81 = vst [vmem:[#allocation2 + $0x8] sm:$0xff] 0.0
      %82 = vst [vmem:[#allocation2 + $0x10] sm:$0xff] 0.0
      %83 = vst [vmem:[#allocation2 + $0x18] sm:$0xff] 0.0
    $region13: #{bce_jaccard_loss.1} parent=1 // pred_fallthru
      _
    %s84 = sadd.s32 0, 0
    %s85 = smul.u32 %s84, 2048
    %v86 = vlaneseq
    %v87 = vshrl.u32 %v86, 7
    %v88 = vadd.s32 %v87, 8
    %v89 = vlaneseq
    %v90 = vand.u32 %v89, 127
    %v91 = vmul.u32 %v87, 128
    %v92 = vmul.u32 %v88, 128
    %v93 = vstv %s85
    %v94 = vadd.s32 %v93, %v91
    %v95 = vadd.s32 %v93, %v92
    %v96 = vadd.s32 %v94, %v90
    %v97 = vadd.s32 %v95, %v90
    %vm98 = vcmp.lt.s32.totalorder %v96, 2048
    %vm99 = vcmp.lt.s32.totalorder %v97, 2048
    %v100 = vld [vmem:[%s59] sm:$0xff]
    %v101 = vld [vmem:[%s59 + $0x8] sm:$0xff]
    %v102 = vsel %vm98, %v100, 0.0
    %v103 = vsel %vm99, %v101, 0.0
    %v104 = vld [vmem:[%s71] sm:$0xff]
    %v105 = vld [vmem:[%s71 + $0x8] sm:$0xff]
    %v106 = vsel %vm98, %v104, 0.0
    %v107 = vsel %vm99, %v105, 0.0
    %v108 = vsel %vm98, 1, 0
    %v109 = vsel %vm99, 1, 0
    %v110 = vcvt.s32.f32 %v108
    %v111 = vcvt.s32.f32 %v109
    %v112 = vand.u32 2147483647, %v102
    %v113 = vand.u32 2147483647, %v103
    %v114 = vsub.f32 0.0, %v112
    %v115 = vsub.f32 0.0, %v113
    %v116 = vmul.f32 %v114, 1.442695
    %v117 = vpow.pop %v116
    %v118 = vmul.f32 %v115, 1.442695
    %v119 = vpow.pop %v118
    %v120 = vadd.f32 %v117, 1.0
    %v121 = vadd.f32 %v119, 1.0
    %v122 = vrcp.pop %v120
    %v123 = vrcp.pop %v121
    %v124 = vmul.f32 %v120, %v122
    %v125 = vmul.f32 %v121, %v123
    %v126 = vsub.f32 2.0, %v124
    %v127 = vsub.f32 2.0, %v125
    %v128 = vmul.f32 %v122, %v126
    %v129 = vmul.f32 %v123, %v127
    %vm130 = vcmp.ge.f32.partialorder %v102, 0.0
    %vm131 = vcmp.ge.f32.partialorder %v103, 0.0
    %v132 = vsel %vm130, 1.0, %v117
    %v133 = vsel %vm131, 1.0, %v119
    %v134 = vmul.f32 %v132, %v128
    %v135 = vmul.f32 %v133, %v129
    %v136 = vmax.f32 %v102, 0.0
    %v137 = vmax.f32 %v103, 0.0
    %v138 = vmul.f32 %v102, %v106
    %v139 = vmul.f32 %v103, %v107
    %v140 = vsub.f32 %v136, %v138
    %v141 = vsub.f32 %v137, %v139
    %v142 = vadd.f32 %v117, 1.0
    %v143 = vlog2.pop %v142
    %v144 = vmul.f32 %v143, 0.6931472
    %v145 = vmul.f32 -0.5, %v117
    %v146 = vadd.f32 %v145, 1.0
    %v147 = vmul.f32 %v146, %v117
    %v148 = vand.u32 2147483647, %v117
    %vm149 = vcmp.lt.f32.partialorder %v148, 0.0004427343
    %v150 = vsel %vm149, %v147, %v144
    %v151 = vadd.f32 %v119, 1.0
    %v152 = vlog2.pop %v151
    %v153 = vmul.f32 %v152, 0.6931472
    %v154 = vmul.f32 -0.5, %v119
    %v155 = vadd.f32 %v154, 1.0
    %v156 = vmul.f32 %v155, %v119
    %v157 = vand.u32 2147483647, %v119
    %vm158 = vcmp.lt.f32.partialorder %v157, 0.0004427343
    %v159 = vsel %vm158, %v156, %v153
    %v160 = vadd.f32 %v140, %v150
    %v161 = vadd.f32 %v141, %v159
    %v162 = vld [vmem:[#allocation2] sm:$0xff]
    %v163 = vmul.f32 %v106, %v134
    %v164 = vmul.f32 %v107, %v135
    %v165 = vadd.f32 %v163, %v164
    %v166 = vadd.f32 %v162, %v165
    %167 = vst [vmem:[#allocation2] sm:$0xff] %v166
    %s168 = scalar_lea.vmem [#allocation2], 8
    %v169 = vld [vmem:[%s168] sm:$0xff]
    %v170 = vmul.f32 %v110, %v134
    %v171 = vmul.f32 %v111, %v135
    %v172 = vadd.f32 %v170, %v171
    %v173 = vadd.f32 %v169, %v172
    %174 = vst [vmem:[%s168] sm:$0xff] %v173
    %s175 = scalar_lea.vmem [#allocation2], 16
    %v176 = vld [vmem:[%s175] sm:$0xff]
    %v177 = vadd.f32 %v106, %v107
    %v178 = vadd.f32 %v176, %v177
    %179 = vst [vmem:[%s175] sm:$0xff] %v178
    %s180 = scalar_lea.vmem [#allocation2], 24
    %v181 = vld [vmem:[%s180] sm:$0xff]
    %v182 = vmul.f32 %v110, %v160
    %v183 = vmul.f32 %v111, %v161
    %v184 = vadd.f32 %v182, %v183
    %v185 = vadd.f32 %v181, %v184
    %186 = vst [vmem:[%s180] sm:$0xff] %v185
    // Predicated region
    $region14: #{bce_jaccard_loss.1} parent=1 // pred_check
      %p187 = pneg %p76
    $region15: #{bce_jaccard_loss.1} parent=1 // pred_check_branch
      %189 = sbr.rel (%p187) target = $region17
    $region16: #{bce_jaccard_loss.1} parent=1 // pred_region
      %v190 = vld [vmem:[#allocation2] sm:$0xff]
      %191 = vadd.xlane.f32.xlu0 %v190
      %v192 = vpop.xlane.xlu0 %191
      %v193 = vrot.slane %v192, 4
      %v194 = vadd.f32 %v192, %v193
      %v195 = vrot.slane %v194, 2
      %v196 = vadd.f32 %v194, %v195
      %v197 = vrot.slane %v196, 1
      %v198 = vadd.f32 %v196, %v197
      %s199 = vtos %v198
      %s200 = scalar_lea.smem [#allocation3], 0
      %201 = sst [smem:[%s200]] %s199
      %v202 = vld [vmem:[%s168] sm:$0xff]
      %203 = vadd.xlane.f32.xlu0 %v202
      %v204 = vpop.xlane.xlu0 %203
      %v205 = vrot.slane %v204, 4
      %v206 = vadd.f32 %v204, %v205
      %v207 = vrot.slane %v206, 2
      %v208 = vadd.f32 %v206, %v207
      %v209 = vrot.slane %v208, 1
      %v210 = vadd.f32 %v208, %v209
      %s211 = vtos %v210
      %s212 = scalar_lea.smem [#allocation3], 1
      %213 = sst [smem:[%s212]] %s211
      %v214 = vld [vmem:[%s175] sm:$0xff]
      %215 = vadd.xlane.f32.xlu0 %v214
      %v216 = vpop.xlane.xlu0 %215
      %v217 = vrot.slane %v216, 4
      %v218 = vadd.f32 %v216, %v217
      %v219 = vrot.slane %v218, 2
      %v220 = vadd.f32 %v218, %v219
      %v221 = vrot.slane %v220, 1
      %v222 = vadd.f32 %v220, %v221
      %s223 = vtos %v222
      %s224 = scalar_lea.smem [#allocation3], 2
      %225 = sst [smem:[%s224]] %s223
      %v226 = vld [vmem:[%s180] sm:$0xff]
      %227 = vadd.xlane.f32.xlu0 %v226
      %v228 = vpop.xlane.xlu0 %227
      %v229 = vrot.slane %v228, 4
      %v230 = vadd.f32 %v228, %v229
      %v231 = vrot.slane %v230, 2
      %v232 = vadd.f32 %v230, %v231
      %v233 = vrot.slane %v232, 1
      %v234 = vadd.f32 %v232, %v233
      %s235 = vtos %v234
      %s236 = scalar_lea.smem [#allocation3], 3
      %237 = sst [smem:[%s236]] %s235
    $region17: #{bce_jaccard_loss.1} parent=1 // pred_fallthru
      _
    // Predicated region
    $region18: #{bce_jaccard_loss.1} parent=1 // pred_check
      _
    $region19: #{bce_jaccard_loss.1} parent=1 // pred_check_branch
      %239 = sbr.rel (0) target = $region21
    $region20: #{bce_jaccard_loss.1} parent=1 // pred_region
      %s241 = ssub.s32 16, 16
      %242 = vsyncadd [#allocation4], %s241
      %s244 = sshll.u32 %s2, 4
      %s245 = int_to_ptr.vmem [resolvable:$true] %s244
      %247 = dma.smem_to_vmem [#allocation3], 16, %s245, [#allocation4]
    $region21: #{bce_jaccard_loss.1} parent=1 // pred_fallthru
      _
    // Predicated region
    $region22: #{bce_jaccard_loss.1} parent=1 // pred_check
      _
    $region23: #{bce_jaccard_loss.1} parent=1 // pred_check_branch
      %249 = sbr.rel (0) target = $region25
    $region24: #{bce_jaccard_loss.1} parent=1 // pred_region
      %250 = dma.done [#allocation4], 16
    $region25: #{bce_jaccard_loss.1} parent=1 // pred_fallthru
      _
    %251 = sfence
    %252 = vsyncpa [#allocation4], 1

</llo_original>
